<compile_context>
chip_gen: v6e
topology: v6e:2x2x1
jax: 0.10.0
libtpu: 0.0.40
codegen_flags: <defaults>
</compile_context>

<pallas_src>
import jax
import jax.numpy as jnp
from jax.experimental import pallas as pl
from jax.experimental.pallas import tpu as pltpu

# TODO(synk): only the 3x3 window (MedianBlur((3, 3)), as used in FCDSN_train)
# is implemented; other kernel sizes would need a different selection network.
KERNEL_SIZE = (3, 3)
KH, KW = KERNEL_SIZE
PH, PW = (KH - 1) // 2, (KW - 1) // 2


def _med3(a, b, c):
    """Element-wise median of three arrays (4 min/max VPU ops)."""
    return jnp.maximum(jnp.minimum(a, b), jnp.minimum(jnp.maximum(a, b), c))


def _make_kernel(H: int, W: int, TB: int):
    HW = H * W

    def kernel(x_ref, o_ref):
        x = x_ref[0]                                       # (TB, HW)
        zero = jnp.zeros((), x.dtype)

        # Border masks (zero padding handled in-kernel -> no padded HBM copy,
        # no index-table input).  Built once and pre-broadcast to (TB, HW) so
        # the 8 selects below don't each re-broadcast a (1, HW) mask.
        k = jax.lax.broadcasted_iota(jnp.int32, (1, HW), 1)
        col = k % W
        not_top = jnp.broadcast_to(k >= W, (TB, HW))
        not_bot = jnp.broadcast_to(k < HW - W, (TB, HW))
        not_left = jnp.broadcast_to(col > 0, (TB, HW))
        not_right = jnp.broadcast_to(col < W - 1, (TB, HW))

        # Vertical neighbours via lane rolls (XLU); zero where padding.
        up = jnp.where(not_top, pltpu.roll(x, W % HW, axis=1), zero)
        dn = jnp.where(not_bot, pltpu.roll(x, (HW - W) % HW, axis=1), zero)

        # One shared vertical sort3 per column -> lo/mid/hi planes (6 min/max).
        t0 = jnp.minimum(up, x)
        t1 = jnp.maximum(up, x)
        lo = jnp.minimum(t0, dn)
        t2 = jnp.maximum(t0, dn)
        mid = jnp.minimum(t1, t2)
        hi = jnp.maximum(t1, t2)

        # Horizontal +-1 column shifts of lo/mid/hi (6 rolls); a missing left /
        # right column is all zero padding, whose sorted triple is (0, 0, 0).
        def lft(v):
            return jnp.where(not_left, pltpu.roll(v, 1 % HW, axis=1), zero)

        def rgt(v):
            return jnp.where(not_right, pltpu.roll(v, (HW - 1) % HW, axis=1), zero)

        # median9 = med3( max3(lo), med3(mid), min3(hi) )  -> 12 more min/max.
        m_lo = jnp.maximum(jnp.maximum(lft(lo), lo), rgt(lo))
        m_hi = jnp.minimum(jnp.minimum(lft(hi), hi), rgt(hi))
        m_mid = _med3(lft(mid), mid, rgt(mid))
        o_ref[0] = _med3(m_lo, m_mid, m_hi)

    return kernel


def _round_up(n: int, m: int) -> int:
    return ((n + m - 1) // m) * m


def _vmem_capacity_bytes() -> int:
    try:
        cap = int(getattr(pltpu.get_tpu_info(), "vmem_capacity_bytes", 0))
        if cap > 0:
            return cap
    except Exception:
        pass
    return 64 << 20  # conservative default (v7x per-TensorCore VMEM)


def _num_tensorcores() -> int:
    try:
        info = pltpu.get_tpu_info()
        for name in ("num_cores", "cores_per_chip", "num_tensorcores"):
            v = getattr(info, name, None)
            if v:
                return int(v)
    except Exception:
        pass
    try:
        if "v7" in jax.devices()[0].device_kind.lower():
            return 2
    except Exception:
        pass
    return 1


def median_blur(x: jax.Array) -> jax.Array:
    """x: (B, C, H, W) -> (B, C, H, W), 3x3 median blur with zero padding."""
    B, C, H, W = x.shape
    BC, HW = B * C, H * W
    dt = x.dtype
    itemsize = jnp.dtype(dt).itemsize
    sub = 8 * max(1, 4 // max(itemsize, 1))      # sublane pack: 8 f32 / 16 bf16 / 32 i8

    # Chip-aware VMEM sizing: tile as large as a conservative compute budget
    # allows (per-step overhead ~0.35us), with headroom under physical VMEM.
    vmem_cap = _vmem_capacity_bytes()
    budget = max(4 << 20, vmem_cap // 4)         # ~32 MiB v5e/v6e, ~16 MiB v7x
    vmem_limit = max(16 << 20, min(vmem_cap * 3 // 4, 100 << 20))
    per_plane = 20 * HW * max(itemsize, 4)       # i/o double-buffers + live temps
    cap_planes = max(1, budget // per_plane)

    BCp = _round_up(BC, sub)
    if cap_planes >= sub:
        # Sublane-dense TB (multiple of the pack factor), as large as fits.
        cands = list(range(sub, min(BCp, (cap_planes // sub) * sub) + 1, sub))
        TB = max(cands)
        ncores = _num_tensorcores()
        if ncores > 1:
            # Prefer a step count that divides evenly across the TensorCores.
            even = [tb for tb in cands if pl.cdiv(BCp, tb) % ncores == 0]
            if even:
                TB = max(even)
    else:
        # TODO(synk): planes too large for one VMEM tile need halo'd row tiling;
        # fall back to one (sublane-sparse) plane per grid step.
        TB = 1

    G = pl.cdiv(BCp, TB)
    BCp = G * TB

    xf = x.reshape(BC, HW)
    if BCp != BC:
        xf = jnp.pad(xf, ((0, BCp - BC), (0, 0)))     # zero planes, sliced off below
    xg = xf.reshape(G, TB, HW)

    cost = pl.CostEstimate(
        flops=40 * BCp * HW,                      # ~18 min/max + 8 selects + masks
        transcendentals=0,
        bytes_accessed=2 * BCp * HW * itemsize,
    )

    out = pl.pallas_call(
        _make_kernel(H, W, TB),
        out_shape=jax.ShapeDtypeStruct((G, TB, HW), dt),
        grid=(G,),
        in_specs=[pl.BlockSpec((1, TB, HW), lambda i: (i, 0, 0))],
        out_specs=pl.BlockSpec((1, TB, HW), lambda i: (i, 0, 0)),
        compiler_params=pltpu.CompilerParams(
            dimension_semantics=("parallel",),
            vmem_limit_bytes=vmem_limit,
        ),
        cost_estimate=cost,
    )(xg)

    return out.reshape(BCp, HW)[:BC].reshape(B, C, H, W)


def _reference_median_blur(x: jax.Array) -> jax.Array:
    """Pure-JAX reference mirroring the PyTorch forward."""
    B, C, H, W = x.shape
    xp = jnp.pad(x, ((0, 0), (0, 0), (PH, PH), (PW, PW)))
    feats = jnp.stack(
        [xp[:, :, dy:dy + H, dx:dx + W] for dy in range(KH) for dx in range(KW)],
        axis=2,
    )                                             # (B, C, 9, H, W)
    return jnp.sort(feats, axis=2)[:, :, (KH * KW - 1) // 2]


if __name__ == "__main__":
    key = jax.random.PRNGKey(0)
    x = jax.random.uniform(key, (2, 4, 16, 16), dtype=jnp.float32)

    out = jax.block_until_ready(median_blur(x))
    ref = _reference_median_blur(x)
    assert out.shape == (2, 4, 16, 16)
    assert jnp.allclose(out, ref, atol=1e-6), "mismatch vs reference"

    # Non-square plane (H != W), B*C not a multiple of 8, and negative values:
    # exercises the row/col border masks and the sublane padding path.
    x2 = jax.random.uniform(jax.random.PRNGKey(1), (1, 3, 8, 16), dtype=jnp.float32) - 0.5
    out2 = jax.block_until_ready(median_blur(x2))
    ref2 = _reference_median_blur(x2)
    assert out2.shape == (1, 3, 8, 16)
    assert jnp.allclose(out2, ref2, atol=1e-6), "mismatch vs reference (non-square)"

    print("KERNEL_OK")
</pallas_src>

<mosaic_0001>
module attributes {stable_mosaic.version = 11 : i64} {
  func.func @kernel(%arg0: i32, %arg1: memref<1x8x256xf32, #tpu.memory_space<vmem>>, %arg2: memref<1x8x256xf32, #tpu.memory_space<vmem>>) attributes {dimension_semantics = [#tpu.dimension_semantics<parallel>], iteration_bounds = array<i64: 1>, scalar_prefetch = 0 : i64, scratch_operands = 0 : i64, tpu.core_type = #tpu.core_type<tc>, window_params = [{transform_indices = @transform_0, window_bounds = array<i64: 1, 8, 256>}, {transform_indices = @transform_1, window_bounds = array<i64: 1, 8, 256>}]} {
    %c0 = arith.constant 0 : index
    %c0_0 = arith.constant 0 : index
    %c0_1 = arith.constant 0 : index
    %0 = vector.load %arg1[%c0, %c0_0, %c0_1] : memref<1x8x256xf32, #tpu.memory_space<vmem>>, vector<1x8x256xf32>
    %1 = vector.shape_cast %0 : vector<1x8x256xf32> to vector<8x256xf32>
    %2 = tpu.iota {dimensions = array<i32: 1>} : vector<1x256xi32>
    %c16_i32 = arith.constant 16 : i32
    %c0_i32 = arith.constant 0 : i32
    %3 = arith.cmpi eq, %c16_i32, %c0_i32 : i32
    %c1_i32 = arith.constant 1 : i32
    %4 = arith.select %3, %c1_i32, %c16_i32 : i32
    %5 = vector.broadcast %4 : i32 to vector<1x256xi32>
    %6 = arith.remsi %2, %5 : vector<1x256xi32>
    %c0_i32_2 = arith.constant 0 : i32
    %7 = vector.broadcast %c0_i32_2 : i32 to vector<1x256xi32>
    %8 = arith.cmpi ne, %6, %7 : vector<1x256xi32>
    %c0_i32_3 = arith.constant 0 : i32
    %9 = vector.broadcast %c0_i32_3 : i32 to vector<1x256xi32>
    %10 = arith.cmpi slt, %6, %9 : vector<1x256xi32>
    %c0_i32_4 = arith.constant 0 : i32
    %11 = arith.cmpi slt, %4, %c0_i32_4 : i32
    %12 = vector.broadcast %11 : i1 to vector<1x256xi1>
    %13 = vector.broadcast %12 : vector<1x256xi1> to vector<1x256xi1>
    %14 = arith.xori %10, %13 : vector<1x256xi1>
    %15 = arith.andi %14, %8 : vector<1x256xi1>
    %16 = vector.broadcast %4 : i32 to vector<1x256xi32>
    %17 = arith.addi %6, %16 : vector<1x256xi32>
    %18 = arith.select %15, %17, %6 : vector<1x256xi1>, vector<1x256xi32>
    %c16_i32_5 = arith.constant 16 : i32
    %19 = vector.broadcast %c16_i32_5 : i32 to vector<1x256xi32>
    %20 = arith.cmpi sge, %2, %19 : vector<1x256xi32>
    %21 = vector.shape_cast %20 : vector<1x256xi1> to vector<1x256xi1>
    %22 = vector.broadcast %21 : vector<1x256xi1> to vector<8x256xi1>
    %c240_i32 = arith.constant 240 : i32
    %23 = vector.broadcast %c240_i32 : i32 to vector<1x256xi32>
    %24 = arith.cmpi slt, %2, %23 : vector<1x256xi32>
    %25 = vector.shape_cast %24 : vector<1x256xi1> to vector<1x256xi1>
    %26 = vector.broadcast %25 : vector<1x256xi1> to vector<8x256xi1>
    %c0_i32_6 = arith.constant 0 : i32
    %27 = vector.broadcast %c0_i32_6 : i32 to vector<1x256xi32>
    %28 = arith.cmpi sgt, %18, %27 : vector<1x256xi32>
    %29 = vector.shape_cast %28 : vector<1x256xi1> to vector<1x256xi1>
    %30 = vector.broadcast %29 : vector<1x256xi1> to vector<8x256xi1>
    %c15_i32 = arith.constant 15 : i32
    %31 = vector.broadcast %c15_i32 : i32 to vector<1x256xi32>
    %32 = arith.cmpi slt, %18, %31 : vector<1x256xi32>
    %33 = vector.shape_cast %32 : vector<1x256xi1> to vector<1x256xi1>
    %34 = vector.broadcast %33 : vector<1x256xi1> to vector<8x256xi1>
    %c16_i32_7 = arith.constant 16 : i32
    %35 = tpu.dynamic_rotate %1 by %c16_i32_7 dim 1 : vector<8x256xf32>, i32 -> vector<8x256xf32>
    %cst = arith.constant 0.000000e+00 : f32
    %36 = vector.broadcast %cst : f32 to vector<8x256xf32>
    %37 = arith.select %22, %35, %36 : vector<8x256xi1>, vector<8x256xf32>
    %c240_i32_8 = arith.constant 240 : i32
    %38 = tpu.dynamic_rotate %1 by %c240_i32_8 dim 1 : vector<8x256xf32>, i32 -> vector<8x256xf32>
    %cst_9 = arith.constant 0.000000e+00 : f32
    %39 = vector.broadcast %cst_9 : f32 to vector<8x256xf32>
    %40 = arith.select %26, %38, %39 : vector<8x256xi1>, vector<8x256xf32>
    %41 = arith.minimumf %37, %1 : vector<8x256xf32>
    %42 = arith.maximumf %37, %1 : vector<8x256xf32>
    %43 = arith.minimumf %41, %40 : vector<8x256xf32>
    %44 = arith.maximumf %41, %40 : vector<8x256xf32>
    %45 = arith.minimumf %42, %44 : vector<8x256xf32>
    %46 = arith.maximumf %42, %44 : vector<8x256xf32>
    %c1_i32_10 = arith.constant 1 : i32
    %47 = tpu.dynamic_rotate %43 by %c1_i32_10 dim 1 : vector<8x256xf32>, i32 -> vector<8x256xf32>
    %cst_11 = arith.constant 0.000000e+00 : f32
    %48 = vector.broadcast %cst_11 : f32 to vector<8x256xf32>
    %49 = arith.select %30, %47, %48 : vector<8x256xi1>, vector<8x256xf32>
    %50 = arith.maximumf %49, %43 : vector<8x256xf32>
    %c255_i32 = arith.constant 255 : i32
    %51 = tpu.dynamic_rotate %43 by %c255_i32 dim 1 : vector<8x256xf32>, i32 -> vector<8x256xf32>
    %cst_12 = arith.constant 0.000000e+00 : f32
    %52 = vector.broadcast %cst_12 : f32 to vector<8x256xf32>
    %53 = arith.select %34, %51, %52 : vector<8x256xi1>, vector<8x256xf32>
    %54 = arith.maximumf %50, %53 : vector<8x256xf32>
    %c1_i32_13 = arith.constant 1 : i32
    %55 = tpu.dynamic_rotate %46 by %c1_i32_13 dim 1 : vector<8x256xf32>, i32 -> vector<8x256xf32>
    %cst_14 = arith.constant 0.000000e+00 : f32
    %56 = vector.broadcast %cst_14 : f32 to vector<8x256xf32>
    %57 = arith.select %30, %55, %56 : vector<8x256xi1>, vector<8x256xf32>
    %58 = arith.minimumf %57, %46 : vector<8x256xf32>
    %c255_i32_15 = arith.constant 255 : i32
    %59 = tpu.dynamic_rotate %46 by %c255_i32_15 dim 1 : vector<8x256xf32>, i32 -> vector<8x256xf32>
    %cst_16 = arith.constant 0.000000e+00 : f32
    %60 = vector.broadcast %cst_16 : f32 to vector<8x256xf32>
    %61 = arith.select %34, %59, %60 : vector<8x256xi1>, vector<8x256xf32>
    %62 = arith.minimumf %58, %61 : vector<8x256xf32>
    %c1_i32_17 = arith.constant 1 : i32
    %63 = tpu.dynamic_rotate %45 by %c1_i32_17 dim 1 : vector<8x256xf32>, i32 -> vector<8x256xf32>
    %cst_18 = arith.constant 0.000000e+00 : f32
    %64 = vector.broadcast %cst_18 : f32 to vector<8x256xf32>
    %65 = arith.select %30, %63, %64 : vector<8x256xi1>, vector<8x256xf32>
    %c255_i32_19 = arith.constant 255 : i32
    %66 = tpu.dynamic_rotate %45 by %c255_i32_19 dim 1 : vector<8x256xf32>, i32 -> vector<8x256xf32>
    %cst_20 = arith.constant 0.000000e+00 : f32
    %67 = vector.broadcast %cst_20 : f32 to vector<8x256xf32>
    %68 = arith.select %34, %66, %67 : vector<8x256xi1>, vector<8x256xf32>
    %69 = arith.minimumf %65, %45 : vector<8x256xf32>
    %70 = arith.maximumf %65, %45 : vector<8x256xf32>
    %71 = arith.minimumf %70, %68 : vector<8x256xf32>
    %72 = arith.maximumf %69, %71 : vector<8x256xf32>
    %73 = arith.minimumf %54, %72 : vector<8x256xf32>
    %74 = arith.maximumf %54, %72 : vector<8x256xf32>
    %75 = arith.minimumf %74, %62 : vector<8x256xf32>
    %76 = arith.maximumf %73, %75 : vector<8x256xf32>
    %c0_21 = arith.constant 0 : index
    %c0_22 = arith.constant 0 : index
    %c0_23 = arith.constant 0 : index
    %77 = vector.load %arg2[%c0_21, %c0_22, %c0_23] : memref<1x8x256xf32, #tpu.memory_space<vmem>>, vector<1x8x256xf32>
    %78 = vector.shape_cast %77 : vector<1x8x256xf32> to vector<8x256xf32>
    %79 = vector.shape_cast %76 : vector<8x256xf32> to vector<1x8x256xf32>
    tpu.vector_store %arg2[%c0_21, %c0_22, %c0_23], %79 {strides = array<i32>} : memref<1x8x256xf32, #tpu.memory_space<vmem>>, vector<1x8x256xf32>,
    return
  }
  func.func @transform_0(%arg0: i32) -> (i32, i32, i32) {
    %c0_i32 = arith.constant 0 : i32
    %c0_i32_0 = arith.constant 0 : i32
    %c0_i32_1 = arith.constant 0 : i32
    return %arg0, %c0_i32, %c0_i32_0 : i32, i32, i32
  }
  func.func @transform_1(%arg0: i32) -> (i32, i32, i32) {
    %c0_i32 = arith.constant 0 : i32
    %c0_i32_0 = arith.constant 0 : i32
    %c0_i32_1 = arith.constant 0 : i32
    return %arg0, %c0_i32, %c0_i32_0 : i32, i32, i32
  }
}

</mosaic_0001>

<llo_original>
// kernel: tpu_custom_call.1
$region0: #{tpu_custom_call.1}
  #allocation0 [shape = 'u32[]', space=smem, size = 0x4, offset = 0x4, fixed_abs, tag = 'smem constant byte address 0x4 - core index']
  #allocation1 [shape = 'u32[144,128]{1,0:T(1,128)}', space=vmem, size = 0x12000, scoped, tag = 'internal scratch']
  %s0 = inlined_call_operand.hbm [shape: f32[1,8,256], index: 0, kind: input, shape index: {}]
  %s1 = inlined_call_operand.hbm [shape: f32[1,8,256], index: 1, kind: output, shape index: {}]
  %s2 = sld [smem:[#allocation0]]
  $region18: #{tpu_custom_call.1} parent=0
    _
  %s4 = ssub.s32 1, %s2
  %s5 = scalar_select 0, %s4, %s2
  $region1: #{tpu_custom_call.1} parent=0
    #allocation2 [shape = 'u8[8192]{0}', space=vmem, size = 0x2000, scoped, tag = 'input window, operand 0, single buffered']
    #allocation3 [shape = 's32[1]{0}', space=sflag, size = 0x4, scoped, tag = 'scoped memory for tpu_custom_call.1']
    #allocation4 [shape = 's32[1]{0}', space=sflag, size = 0x4, scoped, tag = 'scoped memory for tpu_custom_call.1']
    #allocation5 [shape = 'u8[8192]{0}', space=vmem, size = 0x2000, scoped, tag = 'output window, operand 0, single buffered']
    %6 = vsyncpa [#allocation3], 0
    %7 = vsyncpa [#allocation4], 0
    // Predicated region
    $region2: #{tpu_custom_call.1} parent=1 // pred_check
      _
    $region3: #{tpu_custom_call.1} parent=1 // pred_check_branch
      %9 = sbr.rel (0) target = $region5
    $region4: #{tpu_custom_call.1} parent=1 // pred_region
      %s11 = ssub.s32 256, 256
      %12 = vsyncadd [#allocation3], %s11
      %s14 = sshll.u32 [#allocation2], 4
      %s15 = int_to_ptr.vmem [resolvable:$true] %s14
      %17 = dma.hbm_to_vmem [thread:$0]  %s0, 256, %s15, [#allocation3]
    $region5: #{tpu_custom_call.1} parent=1 // pred_fallthru
      _
    // Predicated region
    $region6: #{tpu_custom_call.1} parent=1 // pred_check
      _
    $region7: #{tpu_custom_call.1} parent=1 // pred_check_branch
      %19 = sbr.rel (0) target = $region9
    $region8: #{tpu_custom_call.1} parent=1 // pred_region
      %20 = dma.done [#allocation3], 256
    $region9: #{tpu_custom_call.1} parent=1 // pred_fallthru
      _
    %v21 = vld [vmem:[#allocation2] sm:$0xff]
    %v22 = vld [vmem:[#allocation2 + $0x8] sm:$0xff]
    %v23 = vlaneseq
    %v24 = vand.u32 %v23, 127
    %v25 = vadd.s32 %v24, 128
    %vm26 = vcmp.lt.s32.totalorder %v24, 0
    %v27 = vsub.s32 0, %v24
    %v28 = vsel %vm26, %v27, %v24
    %v29 = vshrl.u32 %v28, 4
    %v30 = vand.u32 %v28, 15
    %v31 = vsub.s32 0, %v30
    %v32 = vsel %vm26, %v31, %v30
    %vm33 = vcmp.lt.s32.totalorder %v25, 0
    %v34 = vsub.s32 0, %v25
    %v35 = vsel %vm33, %v34, %v25
    %v36 = vshrl.u32 %v35, 4
    %v37 = vand.u32 %v35, 15
    %v38 = vsub.s32 0, %v37
    %v39 = vsel %vm33, %v38, %v37
    %vm40 = vcmp.ne.s32.totalorder %v32, 0
    %vm41 = vcmp.ne.s32.totalorder %v39, 0
    %vm42 = vcmp.lt.s32.totalorder %v32, 0
    %vm43 = vcmp.lt.s32.totalorder %v39, 0
    %vm44 = vmand %vm42, %vm40
    %vm45 = vmand %vm43, %vm41
    %v46 = vadd.s32 %v32, 16
    %v47 = vadd.s32 %v39, 16
    %v48 = vsel %vm44, %v46, %v32
    %v49 = vsel %vm45, %v47, %v39
    %vm50 = vcmp.ge.s32.totalorder %v24, 16
    %vm51 = vcmp.ge.s32.totalorder %v25, 16
    %v52 = vsel %vm50, 1, 0
    %v53 = vsel %vm51, 1, 0
    %vm54 = vcmp.eq.s32.totalorder %v52, 1
    %vm55 = vcmp.eq.s32.totalorder %v53, 1
    %vm56 = vcmp.lt.s32.totalorder %v24, 240
    %vm57 = vcmp.lt.s32.totalorder %v25, 240
    %v58 = vsel %vm56, 1, 0
    %v59 = vsel %vm57, 1, 0
    %vm60 = vcmp.eq.s32.totalorder %v58, 1
    %vm61 = vcmp.eq.s32.totalorder %v59, 1
    %vm62 = vcmp.gt.s32.totalorder %v48, 0
    %vm63 = vcmp.gt.s32.totalorder %v49, 0
    %v64 = vsel %vm62, 1, 0
    %v65 = vsel %vm63, 1, 0
    %vm66 = vcmp.eq.s32.totalorder %v64, 1
    %vm67 = vcmp.eq.s32.totalorder %v65, 1
    %vm68 = vcmp.lt.s32.totalorder %v48, 15
    %vm69 = vcmp.lt.s32.totalorder %v49, 15
    %v70 = vsel %vm68, 1, 0
    %v71 = vsel %vm69, 1, 0
    %vm72 = vcmp.eq.s32.totalorder %v70, 1
    %vm73 = vcmp.eq.s32.totalorder %v71, 1
    %74 = vrot.lane.b32.xlu0 %v21, 16
    %v75 = vpop.permute.xlu0 %74
    %76 = vrot.lane.b32.xlu0 %v22, 16
    %v77 = vpop.permute.xlu0 %76
    %vm78 = vcmp.lt.s32.totalorder %v24, 16
    %v79 = vsel %vm78, %v75, %v77
    %v80 = vsel %vm78, %v77, %v75
    %v81 = vsel %vm54, %v80, 0.0
    %v82 = vsel %vm55, %v79, 0.0
    %83 = vrot.lane.b32.xlu0 %v21, 112
    %v84 = vpop.permute.xlu0 %83
    %85 = vrot.lane.b32.xlu0 %v22, 112
    %v86 = vpop.permute.xlu0 %85
    %vm87 = vcmp.lt.s32.totalorder %v24, 112
    %v88 = vsel %vm87, %v84, %v86
    %v89 = vsel %vm87, %v86, %v84
    %v90 = vsel %vm60, %v88, 0.0
    %v91 = vsel %vm61, %v89, 0.0
    %v92 = vmin.f32 %v81, %v21
    %v93 = vmin.f32 %v82, %v22
    %v94 = vmax.f32 %v81, %v21
    %v95 = vmax.f32 %v82, %v22
    %v96 = vmin.f32 %v92, %v90
    %v97 = vmin.f32 %v93, %v91
    %v98 = vmax.f32 %v92, %v90
    %v99 = vmax.f32 %v93, %v91
    %v100 = vmin.f32 %v94, %v98
    %v101 = vmin.f32 %v95, %v99
    %v102 = vmax.f32 %v94, %v98
    %v103 = vmax.f32 %v95, %v99
    %104 = vrot.lane.b32.xlu0 %v96, 1
    %v105 = vpop.permute.xlu0 %104
    %106 = vrot.lane.b32.xlu0 %v97, 1
    %v107 = vpop.permute.xlu0 %106
    %vm108 = vcmp.lt.s32.totalorder %v24, 1
    %v109 = vsel %vm108, %v105, %v107
    %v110 = vsel %vm108, %v107, %v105
    %v111 = vsel %vm66, %v110, 0.0
    %v112 = vsel %vm67, %v109, 0.0
    %v113 = vmax.f32 %v111, %v96
    %v114 = vmax.f32 %v112, %v97
    %115 = vrot.lane.b32.xlu0 %v96, 127
    %v116 = vpop.permute.xlu0 %115
    %117 = vrot.lane.b32.xlu0 %v97, 127
    %v118 = vpop.permute.xlu0 %117
    %vm119 = vcmp.lt.s32.totalorder %v24, 127
    %v120 = vsel %vm119, %v116, %v118
    %v121 = vsel %vm119, %v118, %v116
    %v122 = vsel %vm72, %v120, 0.0
    %v123 = vsel %vm73, %v121, 0.0
    %v124 = vmax.f32 %v113, %v122
    %v125 = vmax.f32 %v114, %v123
    %126 = vrot.lane.b32.xlu0 %v102, 1
    %v127 = vpop.permute.xlu0 %126
    %128 = vrot.lane.b32.xlu0 %v103, 1
    %v129 = vpop.permute.xlu0 %128
    %v130 = vsel %vm108, %v127, %v129
    %v131 = vsel %vm108, %v129, %v127
    %v132 = vsel %vm66, %v131, 0.0
    %v133 = vsel %vm67, %v130, 0.0
    %v134 = vmin.f32 %v132, %v102
    %v135 = vmin.f32 %v133, %v103
    %136 = vrot.lane.b32.xlu0 %v102, 127
    %v137 = vpop.permute.xlu0 %136
    %138 = vrot.lane.b32.xlu0 %v103, 127
    %v139 = vpop.permute.xlu0 %138
    %v140 = vsel %vm119, %v137, %v139
    %v141 = vsel %vm119, %v139, %v137
    %v142 = vsel %vm72, %v140, 0.0
    %v143 = vsel %vm73, %v141, 0.0
    %v144 = vmin.f32 %v134, %v142
    %v145 = vmin.f32 %v135, %v143
    %146 = vrot.lane.b32.xlu0 %v100, 1
    %v147 = vpop.permute.xlu0 %146
    %148 = vrot.lane.b32.xlu0 %v101, 1
    %v149 = vpop.permute.xlu0 %148
    %v150 = vsel %vm108, %v147, %v149
    %v151 = vsel %vm108, %v149, %v147
    %v152 = vsel %vm66, %v151, 0.0
    %v153 = vsel %vm67, %v150, 0.0
    %154 = vrot.lane.b32.xlu0 %v100, 127
    %v155 = vpop.permute.xlu0 %154
    %156 = vrot.lane.b32.xlu0 %v101, 127
    %v157 = vpop.permute.xlu0 %156
    %v158 = vsel %vm119, %v155, %v157
    %v159 = vsel %vm119, %v157, %v155
    %v160 = vsel %vm72, %v158, 0.0
    %v161 = vsel %vm73, %v159, 0.0
    %v162 = vmin.f32 %v152, %v100
    %v163 = vmin.f32 %v153, %v101
    %v164 = vmax.f32 %v152, %v100
    %v165 = vmax.f32 %v153, %v101
    %v166 = vmin.f32 %v164, %v160
    %v167 = vmin.f32 %v165, %v161
    %v168 = vmax.f32 %v162, %v166
    %v169 = vmax.f32 %v163, %v167
    %v170 = vmin.f32 %v124, %v168
    %v171 = vmin.f32 %v125, %v169
    %v172 = vmax.f32 %v124, %v168
    %v173 = vmax.f32 %v125, %v169
    %v174 = vmin.f32 %v172, %v144
    %v175 = vmin.f32 %v173, %v145
    %v176 = vmax.f32 %v170, %v174
    %v177 = vmax.f32 %v171, %v175
    %178 = vst [vmem:[#allocation5] sm:$0xff] %v176
    %179 = vst [vmem:[#allocation5 + $0x8] sm:$0xff] %v177
    // Predicated region
    $region10: #{tpu_custom_call.1} parent=1 // pred_check
      _
    $region11: #{tpu_custom_call.1} parent=1 // pred_check_branch
      %181 = sbr.rel (0) target = $region13
    $region12: #{tpu_custom_call.1} parent=1 // pred_region
      %s183 = ssub.s32 256, 256
      %184 = vsyncadd [#allocation4], %s183
      %s186 = sshll.u32 [#allocation5], 4
      %s187 = int_to_ptr.vmem [resolvable:$true] %s186
      %189 = dma.vmem_to_hbm [thread:$0]  %s187, 256, %s1, [#allocation4]
    $region13: #{tpu_custom_call.1} parent=1 // pred_fallthru
      _
    // Predicated region
    $region14: #{tpu_custom_call.1} parent=1 // pred_check
      _
    $region15: #{tpu_custom_call.1} parent=1 // pred_check_branch
      %191 = sbr.rel (0) target = $region17
    $region16: #{tpu_custom_call.1} parent=1 // pred_region
      %192 = dma.done [#allocation4], 256
    $region17: #{tpu_custom_call.1} parent=1 // pred_fallthru
      _
    %193 = vsyncpa [#allocation3], 1
    %194 = vsyncpa [#allocation4], 1

</llo_original>
